<compile_context>
chip_gen: v5e
topology: v5e:2x2
jax: 0.10.0
libtpu: 0.0.40
codegen_flags: <defaults>
</compile_context>

<pallas_src>
import functools

import jax
import jax.numpy as jnp
from jax.experimental import pallas as pl
from jax.experimental.pallas import tpu as pltpu

D_IN = 16
D_HID = 32
D_OUT = 16

PACK = 8                      # batch rows packed per lane-row
LANE_IN = PACK * D_IN         # 128
LANE_HID = PACK * D_HID       # 256
LANE_OUT = PACK * D_OUT       # 128


def _round_up(n, m):
    return ((n + m - 1) // m) * m


def _ffn_kernel(x_ref, w12_ref, wo_ref, o_ref):
    # x_ref:   [bt8, 128]   packed activation tile (streams through the grid)
    # w12_ref: [128, 512]   [kron(I8,w1.T) | kron(I8,w2.T)], VMEM-resident
    # wo_ref:  [256, 128]   kron(I8, out_proj.T),            VMEM-resident
    # o_ref:   [bt8, 128]   packed output tile (lane-dense store)
    x = x_ref[...]

    # Fused gate projection for all 8 packed rows at once: [bt8, 512], f32 acc.
    h = jnp.dot(x, w12_ref[...], preferred_element_type=jnp.float32)
    h1 = h[:, :LANE_HID]        # packed w1(x)
    h2 = h[:, LANE_HID:]        # packed w2(x)

    # SiLU gate in f32 (v5e VPU/EUP have no bf16); full 128-lane vregs.
    gated = (h1 * jax.nn.sigmoid(h1)) * h2                      # [bt8, 256]

    out = jnp.dot(gated.astype(wo_ref.dtype), wo_ref[...],
                  preferred_element_type=jnp.float32)           # [bt8, 128]
    o_ref[...] = out.astype(o_ref.dtype)


def prepare_weights(w1, w2, w_out):
    """One-time weight prep (PyTorch Linear layout [out, in] -> packed layout).

    Returns:
      w12_bd: [128, 512] = [kron(I8, w1.T) | kron(I8, w2.T)]
      wo_bd:  [256, 128] = kron(I8, out_proj.T)
    """
    eye = jnp.eye(PACK, dtype=w1.dtype)
    w1_bd = jnp.kron(eye, w1.T)                       # [128, 256]
    w2_bd = jnp.kron(eye, w2.T)                       # [128, 256]
    w12_bd = jnp.concatenate([w1_bd, w2_bd], axis=1)  # [128, 512]
    wo_bd = jnp.kron(eye, w_out.T)                    # [256, 128]
    return w12_bd, wo_bd


@functools.partial(jax.jit, static_argnames=("b_tile",))
def feedforward(x, w12_bd, wo_bd, *, b_tile=1024):
    """x: [B, 16]; w12_bd: [128, 512]; wo_bd: [256, 128] (from prepare_weights)."""
    B = x.shape[0]
    # Batch tile: multiple of 64 (so the packed sublane dim bt//8 is a multiple
    # of 8), capped by b_tile; pad B up to a whole number of tiles.
    bt = _round_up(min(b_tile, B), 8 * PACK)
    num_tiles = pl.cdiv(B, bt)
    b_pad = num_tiles * bt
    if b_pad != B:
        x = jnp.pad(x, ((0, b_pad - B), (0, 0)))

    # Contiguous row-major pack: 8 batch rows per lane-row -> lane-dense I/O.
    xp = x.reshape(b_pad // PACK, LANE_IN)
    bt8 = bt // PACK

    out = pl.pallas_call(
        _ffn_kernel,
        out_shape=jax.ShapeDtypeStruct((b_pad // PACK, LANE_OUT), x.dtype),
        grid=(num_tiles,),
        in_specs=[
            pl.BlockSpec((bt8, LANE_IN), lambda i: (i, 0)),         # x streams
            pl.BlockSpec((LANE_IN, 2 * LANE_HID), lambda i: (0, 0)),  # resident
            pl.BlockSpec((LANE_HID, LANE_OUT), lambda i: (0, 0)),     # resident
        ],
        out_specs=pl.BlockSpec((bt8, LANE_OUT), lambda i: (i, 0)),
        compiler_params=pltpu.CompilerParams(
            dimension_semantics=("parallel",)),                     # v7x: 2 TCs
    )(xp, w12_bd, wo_bd)

    out = out.reshape(b_pad, D_OUT)
    return out[:B] if b_pad != B else out


def _init_linear_weight(key, out_features, in_features):
    # Deterministic init mimicking nn.Linear's kaiming-uniform:
    # U(-1/sqrt(fan_in), 1/sqrt(fan_in)), weight shape [out, in].
    bound = 1.0 / jnp.sqrt(jnp.float32(in_features))
    return jax.random.uniform(
        key, (out_features, in_features), dtype=jnp.float32,
        minval=-bound, maxval=bound)


def _reference(x, w1, w2, w_out):
    h1 = x @ w1.T
    h2 = x @ w2.T
    silu = h1 * jax.nn.sigmoid(h1)
    return (silu * h2) @ w_out.T


if __name__ == "__main__":
    key = jax.random.PRNGKey(0)
    kx, k1, k2, k3, kx2 = jax.random.split(key, 5)

    w1 = _init_linear_weight(k1, D_HID, D_IN)        # [32, 16]
    w2 = _init_linear_weight(k2, D_HID, D_IN)        # [32, 16]
    w_out = _init_linear_weight(k3, D_OUT, D_HID)    # [16, 32]

    # One-time weight prep (kept outside the per-call path).
    w12_bd, wo_bd = prepare_weights(w1, w2, w_out)

    # Case 1: multi-step grid (B=256, b_tile=64 -> 4 grid steps, bt8=8).
    B = 256
    x = jax.random.normal(kx, (B, D_IN), dtype=jnp.float32)
    out = jax.block_until_ready(feedforward(x, w12_bd, wo_bd, b_tile=64))
    ref = _reference(x, w1, w2, w_out)
    assert out.shape == (B, D_OUT)
    assert jnp.allclose(out, ref, atol=2e-5, rtol=1e-5), "mismatch vs reference (B=256)"

    # Case 2: ragged batch exercising the padding path (single tile).
    B2 = 10
    x2 = jax.random.normal(kx2, (B2, D_IN), dtype=jnp.float32)
    out2 = jax.block_until_ready(feedforward(x2, w12_bd, wo_bd))
    ref2 = _reference(x2, w1, w2, w_out)
    assert out2.shape == (B2, D_OUT)
    assert jnp.allclose(out2, ref2, atol=2e-5, rtol=1e-5), "mismatch vs reference (B=10)"

    print("KERNEL_OK")
</pallas_src>

<mosaic_0001>
module attributes {stable_mosaic.version = 11 : i64} {
  func.func @_ffn_kernel(%arg0: i32, %arg1: memref<8x128xf32, #tpu.memory_space<vmem>>, %arg2: memref<128x512xf32, #tpu.memory_space<vmem>>, %arg3: memref<256x128xf32, #tpu.memory_space<vmem>>, %arg4: memref<8x128xf32, #tpu.memory_space<vmem>>) attributes {dimension_semantics = [#tpu.dimension_semantics<parallel>], iteration_bounds = array<i64: 4>, scalar_prefetch = 0 : i64, scratch_operands = 0 : i64, tpu.core_type = #tpu.core_type<tc>, window_params = [{transform_indices = @transform_0, window_bounds = array<i64: 8, 128>}, {pipeline_mode = #tpu.pipeline_mode<synchronous>, transform_indices = @transform_1, window_bounds = array<i64: 128, 512>}, {pipeline_mode = #tpu.pipeline_mode<synchronous>, transform_indices = @transform_2, window_bounds = array<i64: 256, 128>}, {transform_indices = @transform_3, window_bounds = array<i64: 8, 128>}]} {
    %c0 = arith.constant 0 : index
    %c0_0 = arith.constant 0 : index
    %0 = vector.load %arg1[%c0, %c0_0] : memref<8x128xf32, #tpu.memory_space<vmem>>, vector<8x128xf32>
    %c0_1 = arith.constant 0 : index
    %c0_2 = arith.constant 0 : index
    %1 = vector.load %arg2[%c0_1, %c0_2] : memref<128x512xf32, #tpu.memory_space<vmem>>, vector<128x512xf32>
    %cst = arith.constant dense<0.000000e+00> : vector<8x512xf32>
    %2 = tpu.matmul %0, %1, %cst {dimension_numbers = #tpu.dot_dimension_numbers<[1], [0], [0], [1], [0, 0, 1, 1], [], []>} : vector<8x128xf32>, vector<128x512xf32>, vector<8x512xf32> -> vector<8x512xf32>
    %3 = vector.extract_strided_slice %2 {offsets = [0, 0], sizes = [8, 256], strides = [1, 1]} : vector<8x512xf32> to vector<8x256xf32>
    %4 = vector.extract_strided_slice %2 {offsets = [0, 256], sizes = [8, 256], strides = [1, 1]} : vector<8x512xf32> to vector<8x256xf32>
    %5 = arith.negf %3 : vector<8x256xf32>
    %6 = math.exp %5 : vector<8x256xf32>
    %cst_3 = arith.constant 1.000000e+00 : f32
    %7 = vector.broadcast %cst_3 : f32 to vector<8x256xf32>
    %8 = arith.addf %7, %6 : vector<8x256xf32>
    %9 = arith.divf %7, %8 : vector<8x256xf32>
    %10 = arith.mulf %3, %9 : vector<8x256xf32>
    %11 = arith.mulf %10, %4 : vector<8x256xf32>
    %c0_4 = arith.constant 0 : index
    %c0_5 = arith.constant 0 : index
    %12 = vector.load %arg3[%c0_4, %c0_5] : memref<256x128xf32, #tpu.memory_space<vmem>>, vector<256x128xf32>
    %cst_6 = arith.constant dense<0.000000e+00> : vector<8x128xf32>
    %13 = tpu.matmul %11, %12, %cst_6 {dimension_numbers = #tpu.dot_dimension_numbers<[1], [0], [0], [1], [0, 0, 1, 1], [], []>} : vector<8x256xf32>, vector<256x128xf32>, vector<8x128xf32> -> vector<8x128xf32>
    %c0_7 = arith.constant 0 : index
    %c0_8 = arith.constant 0 : index
    %14 = vector.load %arg4[%c0_7, %c0_8] : memref<8x128xf32, #tpu.memory_space<vmem>>, vector<8x128xf32>
    tpu.vector_store %arg4[%c0_7, %c0_8], %13 {strides = array<i32>} : memref<8x128xf32, #tpu.memory_space<vmem>>, vector<8x128xf32>,
    return
  }
  func.func @transform_0(%arg0: i32) -> (i32, i32) {
    %c0_i32 = arith.constant 0 : i32
    %c0_i32_0 = arith.constant 0 : i32
    return %arg0, %c0_i32 : i32, i32
  }
  func.func @transform_1(%arg0: i32) -> (i32, i32) {
    %c0_i32 = arith.constant 0 : i32
    %c0_i32_0 = arith.constant 0 : i32
    %c0_i32_1 = arith.constant 0 : i32
    return %c0_i32, %c0_i32_0 : i32, i32
  }
  func.func @transform_2(%arg0: i32) -> (i32, i32) {
    %c0_i32 = arith.constant 0 : i32
    %c0_i32_0 = arith.constant 0 : i32
    %c0_i32_1 = arith.constant 0 : i32
    return %c0_i32, %c0_i32_0 : i32, i32
  }
  func.func @transform_3(%arg0: i32) -> (i32, i32) {
    %c0_i32 = arith.constant 0 : i32
    %c0_i32_0 = arith.constant 0 : i32
    return %arg0, %c0_i32 : i32, i32
  }
}

</mosaic_0001>

<llo_original>
// kernel: feedforward.1
$region0: #{feedforward.1}
  #allocation0 [shape = 'u32[]', space=smem, size = 0x4, offset = 0x4, fixed_abs, tag = 'smem constant byte address 0x4 - core index']
  #allocation1 [shape = 'u32[72,128]{1,0:T(1,128)}', space=vmem, size = 0x9000, scoped, tag = 'internal scratch']
  %s0 = inlined_call_operand.vmem [shape: f32[32,128], index: 0, kind: input, shape index: {}]
  %s1 = inlined_call_operand.vmem [shape: f32[128,512], index: 1, kind: input, shape index: {}]
  %s2 = inlined_call_operand.hbm [shape: f32[256,128], index: 2, kind: input, shape index: {}]
  %s3 = inlined_call_operand.vmem [shape: f32[32,128], index: 3, kind: output, shape index: {}]
  %s4 = sld [smem:[#allocation0]]
  $region49: #{feedforward.1} parent=0
    _
  %s6 = ssub.s32 1, %s4
  %s7 = scalar_select 0, %s6, %s4
  $region1: #{feedforward.1} parent=0
    #allocation2 [shape = 'u8[131072]{0}', space=vmem, size = 0x20000, scoped, tag = 'input window, operand 2, single buffered']
    #allocation3 [shape = 's32[2]{0}', space=sflag, size = 0x8, scoped, tag = 'scoped memory for feedforward.1']
    %8 = vsyncpa [#allocation3], 0
    loop: start=0, step=1, limit=6
    $region2: #{feedforward.1} parent=1 // loop_pre_header
      _
    $region3: #{feedforward.1} parent=1 // loop_header
      %s10 = sphi 0, %s14
      %p11 = scmp.ge.s32.totalorder %s10, 6
      %s20 = sphi 0, %s22
      %s23 = sphi 0, %s20
      %s24 = sphi 0, %s23
      %s40 = sphi 0, %s24
      %s44 = sphi 0, %s44
      %s46 = sphi 0, %s44
      %s47 = sphi 0, %s46
      %s61 = sphi 0, %s47
      %s65 = sphi 0, %s65
      %s67 = sphi 0, %s65
      %s68 = sphi 0, %s67
      %s82 = sphi 0, %s68
      %s88 = sphi 0, %s90
      %s91 = sphi 0, %s88
      %s92 = sphi 0, %s91
      %s108 = sphi 0, %s92
    $region4: #{feedforward.1} parent=1 // loop_header_branch
      %13 = sbr.rel (%p11) target = $region8
    $region5: #{feedforward.1} parent=1 // loop_body
      %s15 = ssub.s32 %s10, 1
      %s16 = ssub.s32 %s10, 2
      %s17 = sadd.s32 %s10, 1
      %s18 = ssub.s32 %s10, %s17
      %p19 = scmp.eq.s32.totalorder %s18, 0
      %s21 = sadd.s32 %s20, 1
      %s22 = scalar_select %p19, %s20, %s21
      %p25 = pneg %p19
      %p26 = scmp.eq.s32.totalorder %s10, 3
      %p27 = por %p25, %p26
      %p28 = scmp.ne.s32.totalorder %s20, %s23
      %p29 = scmp.eq.s32.totalorder %s10, 0
      %p30 = por %p28, %p29
      %p31 = scmp.ne.s32.totalorder %s20, %s23
      %p32 = scmp.eq.s32.totalorder %s15, 3
      %p33 = por %p31, %p32
      %p34 = scmp.ne.s32.totalorder %s23, %s24
      %p35 = scmp.eq.s32.totalorder %s15, 0
      %p36 = por %p34, %p35
      %p37 = scmp.ne.s32.totalorder %s23, %s24
      %p38 = scmp.eq.s32.totalorder %s16, 3
      %p39 = por %p37, %p38
      %p41 = scmp.ne.s32.totalorder %s24, %s40
      %p42 = scmp.eq.s32.totalorder %s16, 0
      %p43 = por %p41, %p42
      %s45 = sadd.s32 %s44, 1
      %p48 = scmp.eq.s32.totalorder %s10, 3
      %p49 = scmp.ne.s32.totalorder %s44, %s46
      %p50 = scmp.eq.s32.totalorder %s10, 0
      %p51 = por %p49, %p50
      %p52 = scmp.ne.s32.totalorder %s44, %s46
      %p53 = scmp.eq.s32.totalorder %s15, 3
      %p54 = por %p52, %p53
      %p55 = scmp.ne.s32.totalorder %s46, %s47
      %p56 = scmp.eq.s32.totalorder %s15, 0
      %p57 = por %p55, %p56
      %p58 = scmp.ne.s32.totalorder %s46, %s47
      %p59 = scmp.eq.s32.totalorder %s16, 3
      %p60 = por %p58, %p59
      %p62 = scmp.ne.s32.totalorder %s47, %s61
      %p63 = scmp.eq.s32.totalorder %s16, 0
      %p64 = por %p62, %p63
      %s66 = sadd.s32 %s65, 1
      %p69 = scmp.eq.s32.totalorder %s10, 3
      %p70 = scmp.ne.s32.totalorder %s65, %s67
      %p71 = scmp.eq.s32.totalorder %s10, 0
      %p72 = por %p70, %p71
      %p73 = scmp.ne.s32.totalorder %s65, %s67
      %p74 = scmp.eq.s32.totalorder %s15, 3
      %p75 = por %p73, %p74
      %p76 = scmp.ne.s32.totalorder %s67, %s68
      %p77 = scmp.eq.s32.totalorder %s15, 0
      %p78 = por %p76, %p77
      %p79 = scmp.ne.s32.totalorder %s67, %s68
      %p80 = scmp.eq.s32.totalorder %s16, 3
      %p81 = por %p79, %p80
      %p83 = scmp.ne.s32.totalorder %s68, %s82
      %p84 = scmp.eq.s32.totalorder %s16, 0
      %p85 = por %p83, %p84
      %s86 = ssub.s32 %s10, %s17
      %p87 = scmp.eq.s32.totalorder %s86, 0
      %s89 = sadd.s32 %s88, 1
      %s90 = scalar_select %p87, %s88, %s89
      %p93 = pneg %p87
      %p94 = scmp.eq.s32.totalorder %s10, 3
      %p95 = por %p93, %p94
      %p96 = scmp.ne.s32.totalorder %s88, %s91
      %p97 = scmp.eq.s32.totalorder %s10, 0
      %p98 = por %p96, %p97
      %p99 = scmp.ne.s32.totalorder %s88, %s91
      %p100 = scmp.eq.s32.totalorder %s15, 3
      %p101 = por %p99, %p100
      %p102 = scmp.ne.s32.totalorder %s91, %s92
      %p103 = scmp.eq.s32.totalorder %s15, 0
      %p104 = por %p102, %p103
      %p105 = scmp.ne.s32.totalorder %s91, %s92
      %p106 = scmp.eq.s32.totalorder %s16, 3
      %p107 = por %p105, %p106
      %p109 = scmp.ne.s32.totalorder %s92, %s108
      %p110 = scmp.eq.s32.totalorder %s16, 0
      %p111 = por %p109, %p110
      %p112 = scmp.le.s32.totalorder 1, %s10
      %p113 = scmp.lt.s32.totalorder %s10, 5
      %p114 = pnand %p112, %p113
      %p115 = pneg %p114
      // Predicated region
      $region9: #{feedforward.1} parent=5 // pred_check
        _
      $region10: #{feedforward.1} parent=5 // pred_check_branch
        %117 = sbr.rel (%p114) target = $region12
      $region11: #{feedforward.1} parent=5 // pred_region
        %s118 = ssub.s32 %s10, 1
        // Predicated region
        $region13: #{feedforward.1} parent=11 // pred_check
          %p119 = pneg %p57
        $region14: #{feedforward.1} parent=11 // pred_check_branch
          %121 = sbr.rel (%p119) target = $region16
        $region15: #{feedforward.1} parent=11 // pred_region
          _
        $region16: #{feedforward.1} parent=11 // pred_fallthru
          _
        // Predicated region
        $region17: #{feedforward.1} parent=11 // pred_check
          %p122 = pneg %p78
        $region18: #{feedforward.1} parent=11 // pred_check_branch
          %124 = sbr.rel (%p122) target = $region20
        $region19: #{feedforward.1} parent=11 // pred_region
          %126 = vsyncadd [#allocation3], 0
          %s127 = sshll.u32 %s2, 4
          %s128 = int_to_ptr.hbm [resolvable:$true] %s127
          %s129 = sshll.u32 [#allocation2], 4
          %s130 = int_to_ptr.vmem [resolvable:$true] %s129
          %135 = dma.hbm_to_vmem [thread:$0]  %s128, 4096, %s130, [#allocation3], 128, 128, 8
        $region20: #{feedforward.1} parent=11 // pred_fallthru
          _
      $region12: #{feedforward.1} parent=5 // pred_fallthru
        _
      %p136 = scmp.lt.s32.totalorder %s10, 4
      // Predicated region
      $region21: #{feedforward.1} parent=5 // pred_check
        %p137 = pneg %p136
      $region22: #{feedforward.1} parent=5 // pred_check_branch
        %139 = sbr.rel (%p137) target = $region24
      $region23: #{feedforward.1} parent=5 // pred_region
        // Predicated region
        $region25: #{feedforward.1} parent=23 // pred_check
          %p140 = pneg %p30
        $region26: #{feedforward.1} parent=23 // pred_check_branch
          %142 = sbr.rel (%p140) target = $region28
        $region27: #{feedforward.1} parent=23 // pred_region
          %p143 = scmp.lt.s32.totalorder %s10, 3
          %s144 = scalar_select %p143, %s10, 3
          %s145 = smul.addr %s144, 8
          %s146 = scalar_lea.vmem %s0, %s145
        $region28: #{feedforward.1} parent=23 // pred_fallthru
          _
      $region24: #{feedforward.1} parent=5 // pred_fallthru
        _
      %p147 = scmp.le.s32.totalorder 1, %s10
      %p148 = scmp.lt.s32.totalorder %s10, 5
      %p149 = pnand %p147, %p148
      %p150 = pneg %p149
      // Predicated region
      $region29: #{feedforward.1} parent=5 // pred_check
        _
      $region30: #{feedforward.1} parent=5 // pred_check_branch
        %152 = sbr.rel (%p149) target = $region32
      $region31: #{feedforward.1} parent=5 // pred_region
        %s153 = ssub.s32 %s10, 1
        // Predicated region
        $region33: #{feedforward.1} parent=31 // pred_check
          %p154 = pneg %p78
        $region34: #{feedforward.1} parent=31 // pred_check_branch
          %156 = sbr.rel (%p154) target = $region36
        $region35: #{feedforward.1} parent=31 // pred_region
          %158 = dma.done [#allocation3], 4096
        $region36: #{feedforward.1} parent=31 // pred_fallthru
          _
        %p159 = scmp.lt.s32.totalorder %s15, 3
        %s160 = scalar_select %p159, %s15, 3
        %s161 = smul.addr %s160, 8
        %s162 = scalar_lea.vmem %s0, %s161
        %p163 = pneg %p36
        %p164 = pneg %p33
        %p165 = pneg %p57
        %p166 = pneg %p54
        %p167 = pneg %p78
        %p168 = pneg %p75
        %p169 = pneg %p104
        %p170 = pneg %p101
        %p171 = scmp.lt.s32.totalorder %s15, 3
        %s172 = scalar_select %p171, %s15, 3
        %s173 = smul.addr %s172, 8
        %s174 = scalar_lea.vmem %s3, %s173
        %p175 = scmp.lt.s32.totalorder %s15, 3
        %s176 = scalar_select %p175, %s15, 3
        %s177 = smul.addr %s176, 8
        %s178 = scalar_lea.vmem %s0, %s177
        %p179 = scmp.lt.s32.totalorder %s15, 3
        %s180 = scalar_select %p179, %s15, 3
        %s181 = smul.addr %s180, 8
        %s182 = scalar_lea.vmem %s3, %s181
        %v183 = vld [vmem:[%s178] sm:$0xff]
        %v184 = vld [vmem:[%s1] sm:$0xff]
        %v185 = vld [vmem:[%s1 + $0x8] sm:$0xff]
        %v186 = vld [vmem:[%s1 + $0x10] sm:$0xff]
        %v187 = vld [vmem:[%s1 + $0x18] sm:$0xff]
        %v188 = vld [vmem:[%s1 + $0x20] sm:$0xff]
        %v189 = vld [vmem:[%s1 + $0x28] sm:$0xff]
        %v190 = vld [vmem:[%s1 + $0x30] sm:$0xff]
        %v191 = vld [vmem:[%s1 + $0x38] sm:$0xff]
        %v192 = vld [vmem:[%s1 + $0x40] sm:$0xff]
        %v193 = vld [vmem:[%s1 + $0x48] sm:$0xff]
        %v194 = vld [vmem:[%s1 + $0x50] sm:$0xff]
        %v195 = vld [vmem:[%s1 + $0x58] sm:$0xff]
        %v196 = vld [vmem:[%s1 + $0x60] sm:$0xff]
        %v197 = vld [vmem:[%s1 + $0x68] sm:$0xff]
        %v198 = vld [vmem:[%s1 + $0x70] sm:$0xff]
        %v199 = vld [vmem:[%s1 + $0x78] sm:$0xff]
        %v200 = vld [vmem:[%s1 + $0x80] sm:$0xff]
        %v201 = vld [vmem:[%s1 + $0x88] sm:$0xff]
        %v202 = vld [vmem:[%s1 + $0x90] sm:$0xff]
        %v203 = vld [vmem:[%s1 + $0x98] sm:$0xff]
        %v204 = vld [vmem:[%s1 + $0xa0] sm:$0xff]
        %v205 = vld [vmem:[%s1 + $0xa8] sm:$0xff]
        %v206 = vld [vmem:[%s1 + $0xb0] sm:$0xff]
        %v207 = vld [vmem:[%s1 + $0xb8] sm:$0xff]
        %v208 = vld [vmem:[%s1 + $0xc0] sm:$0xff]
        %v209 = vld [vmem:[%s1 + $0xc8] sm:$0xff]
        %v210 = vld [vmem:[%s1 + $0xd0] sm:$0xff]
        %v211 = vld [vmem:[%s1 + $0xd8] sm:$0xff]
        %v212 = vld [vmem:[%s1 + $0xe0] sm:$0xff]
        %v213 = vld [vmem:[%s1 + $0xe8] sm:$0xff]
        %v214 = vld [vmem:[%s1 + $0xf0] sm:$0xff]
        %v215 = vld [vmem:[%s1 + $0xf8] sm:$0xff]
        %v216 = vld [vmem:[%s1 + $0x100] sm:$0xff]
        %v217 = vld [vmem:[%s1 + $0x108] sm:$0xff]
        %v218 = vld [vmem:[%s1 + $0x110] sm:$0xff]
        %v219 = vld [vmem:[%s1 + $0x118] sm:$0xff]
        %v220 = vld [vmem:[%s1 + $0x120] sm:$0xff]
        %v221 = vld [vmem:[%s1 + $0x128] sm:$0xff]
        %v222 = vld [vmem:[%s1 + $0x130] sm:$0xff]
        %v223 = vld [vmem:[%s1 + $0x138] sm:$0xff]
        %v224 = vld [vmem:[%s1 + $0x140] sm:$0xff]
        %v225 = vld [vmem:[%s1 + $0x148] sm:$0xff]
        %v226 = vld [vmem:[%s1 + $0x150] sm:$0xff]
        %v227 = vld [vmem:[%s1 + $0x158] sm:$0xff]
        %v228 = vld [vmem:[%s1 + $0x160] sm:$0xff]
        %v229 = vld [vmem:[%s1 + $0x168] sm:$0xff]
        %v230 = vld [vmem:[%s1 + $0x170] sm:$0xff]
        %v231 = vld [vmem:[%s1 + $0x178] sm:$0xff]
        %v232 = vld [vmem:[%s1 + $0x180] sm:$0xff]
        %v233 = vld [vmem:[%s1 + $0x188] sm:$0xff]
        %v234 = vld [vmem:[%s1 + $0x190] sm:$0xff]
        %v235 = vld [vmem:[%s1 + $0x198] sm:$0xff]
        %v236 = vld [vmem:[%s1 + $0x1a0] sm:$0xff]
        %v237 = vld [vmem:[%s1 + $0x1a8] sm:$0xff]
        %v238 = vld [vmem:[%s1 + $0x1b0] sm:$0xff]
        %v239 = vld [vmem:[%s1 + $0x1b8] sm:$0xff]
        %v240 = vld [vmem:[%s1 + $0x1c0] sm:$0xff]
        %v241 = vld [vmem:[%s1 + $0x1c8] sm:$0xff]
        %v242 = vld [vmem:[%s1 + $0x1d0] sm:$0xff]
        %v243 = vld [vmem:[%s1 + $0x1d8] sm:$0xff]
        %v244 = vld [vmem:[%s1 + $0x1e0] sm:$0xff]
        %v245 = vld [vmem:[%s1 + $0x1e8] sm:$0xff]
        %v246 = vld [vmem:[%s1 + $0x1f0] sm:$0xff]
        %v247 = vld [vmem:[%s1 + $0x1f8] sm:$0xff]
        %248 = vmatpush.msra.mxu0 %v244
        %249 = vmatpush.msra.mxu0 %v240
        %250 = vmatpush.msra.mxu0 %v236
        %251 = vmatpush.msra.mxu0 %v232
        %252 = vmatpush.msra.mxu0 %v228
        %253 = vmatpush.msra.mxu0 %v224
        %254 = vmatpush.msra.mxu0 %v220
        %255 = vmatpush.msra.mxu0 %v216
        %256 = vmatpush.msra.mxu0 %v212
        %257 = vmatpush.msra.mxu0 %v208
        %258 = vmatpush.msra.mxu0 %v204
        %259 = vmatpush.msra.mxu0 %v200
        %260 = vmatpush.msra.mxu0 %v196
        %261 = vmatpush.msra.mxu0 %v192
        %262 = vmatpush.msra.mxu0 %v188
        %263 = vmatpush.msra.mxu0 %v184
        %264 = vmatmul.f32.gmra.mxu0 %v183
        %v265 = vpop.f32.mrf.mxu0
        %v266 = vadd.f32 0.0, %v265
        %267 = vdwg.mxu0
        %268 = vmatpush.msra.mxu0 %v245
        %269 = vmatpush.msra.mxu0 %v241
        %270 = vmatpush.msra.mxu0 %v237
        %271 = vmatpush.msra.mxu0 %v233
        %272 = vmatpush.msra.mxu0 %v229
        %273 = vmatpush.msra.mxu0 %v225
        %274 = vmatpush.msra.mxu0 %v221
        %275 = vmatpush.msra.mxu0 %v217
        %276 = vmatpush.msra.mxu0 %v213
        %277 = vmatpush.msra.mxu0 %v209
        %278 = vmatpush.msra.mxu0 %v205
        %279 = vmatpush.msra.mxu0 %v201
        %280 = vmatpush.msra.mxu0 %v197
        %281 = vmatpush.msra.mxu0 %v193
        %282 = vmatpush.msra.mxu0 %v189
        %283 = vmatpush.msra.mxu0 %v185
        %284 = vmatmul.f32.gmra.mxu0 %v183
        %v285 = vpop.f32.mrf.mxu0
        %v286 = vadd.f32 0.0, %v285
        %287 = vdwg.mxu0
        %288 = vmatpush.msra.mxu0 %v246
        %289 = vmatpush.msra.mxu0 %v242
        %290 = vmatpush.msra.mxu0 %v238
        %291 = vmatpush.msra.mxu0 %v234
        %292 = vmatpush.msra.mxu0 %v230
        %293 = vmatpush.msra.mxu0 %v226
        %294 = vmatpush.msra.mxu0 %v222
        %295 = vmatpush.msra.mxu0 %v218
        %296 = vmatpush.msra.mxu0 %v214
        %297 = vmatpush.msra.mxu0 %v210
        %298 = vmatpush.msra.mxu0 %v206
        %299 = vmatpush.msra.mxu0 %v202
        %300 = vmatpush.msra.mxu0 %v198
        %301 = vmatpush.msra.mxu0 %v194
        %302 = vmatpush.msra.mxu0 %v190
        %303 = vmatpush.msra.mxu0 %v186
        %304 = vmatmul.f32.gmra.mxu0 %v183
        %v305 = vpop.f32.mrf.mxu0
        %v306 = vadd.f32 0.0, %v305
        %307 = vdwg.mxu0
        %308 = vmatpush.msra.mxu0 %v247
        %309 = vmatpush.msra.mxu0 %v243
        %310 = vmatpush.msra.mxu0 %v239
        %311 = vmatpush.msra.mxu0 %v235
        %312 = vmatpush.msra.mxu0 %v231
        %313 = vmatpush.msra.mxu0 %v227
        %314 = vmatpush.msra.mxu0 %v223
        %315 = vmatpush.msra.mxu0 %v219
        %316 = vmatpush.msra.mxu0 %v215
        %317 = vmatpush.msra.mxu0 %v211
        %318 = vmatpush.msra.mxu0 %v207
        %319 = vmatpush.msra.mxu0 %v203
        %320 = vmatpush.msra.mxu0 %v199
        %321 = vmatpush.msra.mxu0 %v195
        %322 = vmatpush.msra.mxu0 %v191
        %323 = vmatpush.msra.mxu0 %v187
        %324 = vmatmul.f32.gmra.mxu0 %v183
        %v325 = vpop.f32.mrf.mxu0
        %v326 = vadd.f32 0.0, %v325
        %327 = vdwg.mxu0
        %v328 = vxor.u32 %v266, 2147483648
        %v329 = vxor.u32 %v286, 2147483648
        %v330 = vmul.f32 %v328, 1.442695
        %v331 = vpow.pop %v330
        %v332 = vmul.f32 %v329, 1.442695
        %v333 = vpow.pop %v332
        %v334 = vadd.f32 %v331, 1.0
        %v335 = vadd.f32 %v333, 1.0
        %v336 = vrcp.pop %v334
        %v337 = vmul.f32 %v334, %v336
        %v338 = vsub.f32 1.0, %v337
        %v339 = vmul.f32 %v336, %v338
        %v340 = vadd.f32 %v336, %v339
        %vm341 = vweird.f32 %v334
        %vm342 = vweird.f32 %v336
        %vm343 = vmor %vm341, %vm342
        %v344 = vsel %vm343, %v336, %v340
        %v345 = vand.u32 2147483647, %v334
        %vm346 = vcmp.eq.f32.partialorder %v345, 8.507059e+37
        %v347 = vand.u32 %v334, 2147483648
        %v348 = vor.u32 1.1754944e-38, %v347
        %v349 = vsel %vm346, %v348, %v344
        %v350 = vmul.f32 1.0, %v349
        %v351 = vrcp.pop %v335
        %v352 = vmul.f32 %v335, %v351
        %v353 = vsub.f32 1.0, %v352
        %v354 = vmul.f32 %v351, %v353
        %v355 = vadd.f32 %v351, %v354
        %vm356 = vweird.f32 %v335
        %vm357 = vweird.f32 %v351
        %vm358 = vmor %vm356, %vm357
        %v359 = vsel %vm358, %v351, %v355
        %v360 = vand.u32 2147483647, %v335
        %vm361 = vcmp.eq.f32.partialorder %v360, 8.507059e+37
        %v362 = vand.u32 %v335, 2147483648
        %v363 = vor.u32 1.1754944e-38, %v362
        %v364 = vsel %vm361, %v363, %v359
        %v365 = vmul.f32 1.0, %v364
        %v366 = vmul.f32 %v266, %v350
        %v367 = vmul.f32 %v286, %v365
        %v368 = vmul.f32 %v366, %v306
        %v369 = vmul.f32 %v367, %v326
        %v370 = vld [vmem:[#allocation2] sm:$0xff]
        %v371 = vld [vmem:[#allocation2 + $0x8] sm:$0xff]
        %v372 = vld [vmem:[#allocation2 + $0x10] sm:$0xff]
        %v373 = vld [vmem:[#allocation2 + $0x18] sm:$0xff]
        %v374 = vld [vmem:[#allocation2 + $0x20] sm:$0xff]
        %v375 = vld [vmem:[#allocation2 + $0x28] sm:$0xff]
        %v376 = vld [vmem:[#allocation2 + $0x30] sm:$0xff]
        %v377 = vld [vmem:[#allocation2 + $0x38] sm:$0xff]
        %v378 = vld [vmem:[#allocation2 + $0x40] sm:$0xff]
        %v379 = vld [vmem:[#allocation2 + $0x48] sm:$0xff]
        %v380 = vld [vmem:[#allocation2 + $0x50] sm:$0xff]
        %v381 = vld [vmem:[#allocation2 + $0x58] sm:$0xff]
        %v382 = vld [vmem:[#allocation2 + $0x60] sm:$0xff]
        %v383 = vld [vmem:[#allocation2 + $0x68] sm:$0xff]
        %v384 = vld [vmem:[#allocation2 + $0x70] sm:$0xff]
        %v385 = vld [vmem:[#allocation2 + $0x78] sm:$0xff]
        %v386 = vld [vmem:[#allocation2 + $0x80] sm:$0xff]
        %v387 = vld [vmem:[#allocation2 + $0x88] sm:$0xff]
        %v388 = vld [vmem:[#allocation2 + $0x90] sm:$0xff]
        %v389 = vld [vmem:[#allocation2 + $0x98] sm:$0xff]
        %v390 = vld [vmem:[#allocation2 + $0xa0] sm:$0xff]
        %v391 = vld [vmem:[#allocation2 + $0xa8] sm:$0xff]
        %v392 = vld [vmem:[#allocation2 + $0xb0] sm:$0xff]
        %v393 = vld [vmem:[#allocation2 + $0xb8] sm:$0xff]
        %v394 = vld [vmem:[#allocation2 + $0xc0] sm:$0xff]
        %v395 = vld [vmem:[#allocation2 + $0xc8] sm:$0xff]
        %v396 = vld [vmem:[#allocation2 + $0xd0] sm:$0xff]
        %v397 = vld [vmem:[#allocation2 + $0xd8] sm:$0xff]
        %v398 = vld [vmem:[#allocation2 + $0xe0] sm:$0xff]
        %v399 = vld [vmem:[#allocation2 + $0xe8] sm:$0xff]
        %v400 = vld [vmem:[#allocation2 + $0xf0] sm:$0xff]
        %v401 = vld [vmem:[#allocation2 + $0xf8] sm:$0xff]
        %402 = vmatpush.msra.mxu0 %v385
        %403 = vmatpush.msra.mxu0 %v384
        %404 = vmatpush.msra.mxu0 %v383
        %405 = vmatpush.msra.mxu0 %v382
        %406 = vmatpush.msra.mxu0 %v381
        %407 = vmatpush.msra.mxu0 %v380
        %408 = vmatpush.msra.mxu0 %v379
        %409 = vmatpush.msra.mxu0 %v378
        %410 = vmatpush.msra.mxu0 %v377
        %411 = vmatpush.msra.mxu0 %v376
        %412 = vmatpush.msra.mxu0 %v375
        %413 = vmatpush.msra.mxu0 %v374
        %414 = vmatpush.msra.mxu0 %v373
        %415 = vmatpush.msra.mxu0 %v372
        %416 = vmatpush.msra.mxu0 %v371
        %417 = vmatpush.msra.mxu0 %v370
        %418 = vmatmul.f32.gmra.mxu0 %v368
        %v419 = vpop.f32.mrf.mxu0
        %v420 = vadd.f32 0.0, %v419
        %421 = vdwg.mxu0
        %422 = vmatpush.msra.mxu0 %v401
        %423 = vmatpush.msra.mxu0 %v400
        %424 = vmatpush.msra.mxu0 %v399
        %425 = vmatpush.msra.mxu0 %v398
        %426 = vmatpush.msra.mxu0 %v397
        %427 = vmatpush.msra.mxu0 %v396
        %428 = vmatpush.msra.mxu0 %v395
        %429 = vmatpush.msra.mxu0 %v394
        %430 = vmatpush.msra.mxu0 %v393
        %431 = vmatpush.msra.mxu0 %v392
        %432 = vmatpush.msra.mxu0 %v391
        %433 = vmatpush.msra.mxu0 %v390
        %434 = vmatpush.msra.mxu0 %v389
        %435 = vmatpush.msra.mxu0 %v388
        %436 = vmatpush.msra.mxu0 %v387
        %437 = vmatpush.msra.mxu0 %v386
        %438 = vmatmul.f32.gmra.mxu0 %v369
        %v439 = vpop.f32.mrf.mxu0
        %v440 = vadd.f32 %v420, %v439
        %441 = vdwg.mxu0
        %442 = vst [vmem:[%s182] sm:$0xff] %v440
        %p443 = scmp.lt.s32.totalorder %s15, 3
        %s444 = scalar_select %p443, %s15, 3
        %s445 = smul.addr %s444, 8
        %s446 = scalar_lea.vmem %s3, %s445
        // Predicated region
        $region37: #{feedforward.1} parent=31 // pred_check
          %p447 = pneg %p101
        $region38: #{feedforward.1} parent=31 // pred_check_branch
          %449 = sbr.rel (%p447) target = $region40
        $region39: #{feedforward.1} parent=31 // pred_region
          _
        $region40: #{feedforward.1} parent=31 // pred_fallthru
          _
      $region32: #{feedforward.1} parent=5 // pred_fallthru
        _
      %p450 = scmp.le.s32.totalorder 2, %s10
      // Predicated region
      $region41: #{feedforward.1} parent=5 // pred_check
        %p451 = pneg %p450
      $region42: #{feedforward.1} parent=5 // pred_check_branch
        %453 = sbr.rel (%p451) target = $region44
      $region43: #{feedforward.1} parent=5 // pred_region
        %s454 = ssub.s32 %s10, 2
        // Predicated region
        $region45: #{feedforward.1} parent=43 // pred_check
          %p455 = pneg %p107
        $region46: #{feedforward.1} parent=43 // pred_check_branch
          %457 = sbr.rel (%p455) target = $region48
        $region47: #{feedforward.1} parent=43 // pred_region
          %p458 = scmp.lt.s32.totalorder %s16, 3
          %s459 = scalar_select %p458, %s16, 3
          %s460 = smul.addr %s459, 8
          %s461 = scalar_lea.vmem %s3, %s460
        $region48: #{feedforward.1} parent=43 // pred_fallthru
          _
      $region44: #{feedforward.1} parent=5 // pred_fallthru
        _
    $region6: #{feedforward.1} parent=1 // loop_footer
      %s14 = sadd.s32 1, %s10
    $region7: #{feedforward.1} parent=1 // loop_footer_branch
      %9 = sbr.rel target = $region3
    $region8: #{feedforward.1} parent=1 // loop_exit
      _
    %462 = vsyncpa [#allocation3], 1
    %s463 = scalar_lea.sflag [#allocation3], 1
    %464 = vsyncpa %s463, 1

</llo_original>
